<compile_context>
chip_gen: v6e
topology: v6e:2x2x1
jax: 0.10.0
libtpu: 0.0.40
codegen_flags: <defaults>
</compile_context>

<pallas_src>
import math

import jax
import jax.numpy as jnp
from jax.experimental import pallas as pl
from jax.experimental.pallas import tpu as pltpu


def _round_up(v: int, m: int) -> int:
    return ((v + m - 1) // m) * m


def _vmem_capacity_bytes() -> int:
    try:
        return int(pltpu.get_tpu_info().vmem_capacity_bytes)
    except Exception:
        return 64 * 1024 * 1024  # conservative default: v7x per-TensorCore VMEM


def _pick_tile(dim: int, candidates=(512, 256, 128)) -> int:
    for t in candidates:
        if dim % t == 0:
            return t
    return dim  # not lane-aligned: use the full (exact) dimension as a single block


# ---------------------------------------------------------------------------
# Fused, weight-resident kernel: all layers in one grid step per row tile.
# ---------------------------------------------------------------------------
def _make_fused_mlp_kernel(num_layers: int):
    def kernel(*refs):
        # refs = (x_ref, w0, b0, w1, b1, ..., w_{L-1}, b_{L-1}, out_ref)
        x_ref = refs[0]
        out_ref = refs[-1]
        param_refs = refs[1:-1]

        z = x_ref[...].astype(jnp.bfloat16)  # cast in-kernel (no wrapper pass over x)
        for i in range(num_layers):
            w = param_refs[2 * i][...]        # bf16 (Din, Dout_p)
            b = param_refs[2 * i + 1][...]    # f32  (1, Dout_p)
            z = jnp.dot(z, w, preferred_element_type=jnp.float32) + b
            if i != num_layers - 1:
                # ReLU (norm='none', dropout=0.0 => identity); back to bf16 for the next MXU op.
                z = jnp.maximum(z, 0.0).astype(jnp.bfloat16)

        if num_layers > 1:
            # F.normalize(z, dim=-1): padded columns are exactly zero, so reduction is exact.
            sq = jnp.sum(z * z, axis=-1, keepdims=True)
            z = z * jax.lax.rsqrt(jnp.maximum(sq, 1e-24))

        out_ref[...] = z.astype(out_ref.dtype)

    return kernel


# ---------------------------------------------------------------------------
# Streaming fallback: per-layer tiled matmul (+bias, +ReLU) and a normalize kernel.
# ---------------------------------------------------------------------------
def _make_linear_kernel(apply_relu: bool):
    def kernel(x_ref, w_ref, b_ref, o_ref, acc_ref):
        @pl.when(pl.program_id(2) == 0)
        def _():
            acc_ref[...] = jnp.zeros_like(acc_ref)

        acc_ref[...] += jnp.dot(x_ref[...].astype(jnp.bfloat16), w_ref[...],
                                preferred_element_type=jnp.float32)

        @pl.when(pl.program_id(2) == pl.num_programs(2) - 1)
        def _():
            z = acc_ref[...] + b_ref[...]
            if apply_relu:
                z = jnp.maximum(z, 0.0)
            o_ref[...] = z.astype(o_ref.dtype)

    return kernel


def _linear_pallas(x, w_p, b_p, apply_relu, *, tm, vmem_cap):
    M, K = x.shape
    N = w_p.shape[1]
    tk = _pick_tile(K)
    tn = _pick_tile(N)
    grid = (M // tm, N // tn, K // tk)

    per_step = (2 * tm * tk * x.dtype.itemsize + 2 * tk * tn * 2 + 2 * tn * 4
                + 2 * tm * tn * 2 + tm * tn * 4)
    vmem_limit = min(int(0.75 * vmem_cap), max(32 << 20, 2 * per_step))

    return pl.pallas_call(
        _make_linear_kernel(apply_relu),
        out_shape=jax.ShapeDtypeStruct((M, N), jnp.bfloat16),
        grid=grid,
        in_specs=[pl.BlockSpec((tm, tk), lambda i, j, k: (i, k)),
                  pl.BlockSpec((tk, tn), lambda i, j, k: (k, j)),
                  pl.BlockSpec((1, tn), lambda i, j, k: (0, j))],
        out_specs=pl.BlockSpec((tm, tn), lambda i, j, k: (i, j)),
        scratch_shapes=[pltpu.VMEM((tm, tn), jnp.float32)],
        compiler_params=pltpu.CompilerParams(
            dimension_semantics=("parallel", "parallel", "arbitrary"),
            vmem_limit_bytes=int(vmem_limit)),
    )(x, w_p, b_p)


def _l2norm_kernel(x_ref, o_ref):
    z = x_ref[...].astype(jnp.float32)
    sq = jnp.sum(z * z, axis=-1, keepdims=True)
    o_ref[...] = (z * jax.lax.rsqrt(jnp.maximum(sq, 1e-24))).astype(o_ref.dtype)


def _l2norm_pallas(x, *, tm, vmem_cap):
    M, D = x.shape
    per_step = 2 * tm * D * x.dtype.itemsize + 2 * tm * D * 2 + tm * D * 4
    vmem_limit = min(int(0.75 * vmem_cap), max(32 << 20, 2 * per_step))
    return pl.pallas_call(
        _l2norm_kernel,
        out_shape=jax.ShapeDtypeStruct((M, D), jnp.bfloat16),
        grid=(M // tm,),
        in_specs=[pl.BlockSpec((tm, D), lambda i: (i, 0))],
        out_specs=pl.BlockSpec((tm, D), lambda i: (i, 0)),
        compiler_params=pltpu.CompilerParams(
            dimension_semantics=("parallel",),
            vmem_limit_bytes=int(vmem_limit)),
    )(x)


# ---------------------------------------------------------------------------
# Wrapper
# ---------------------------------------------------------------------------
def mlp_forward(x, weights, biases, *, tm_max: int = 512, out_dtype=jnp.float32,
                force_stream_weights: bool = False):
    """x: (N, input_dim). weights[i]: (in_dim_i, out_dim_i). biases[i]: (out_dim_i,).
    Returns (N, output_dim) matching the PyTorch forward (norm='none', no residual, jk=False)."""
    num_layers = len(weights)
    n, d_in = x.shape
    out_dim = weights[-1].shape[1]

    # Feature dims: pad all layer-output dims to multiples of 128 (lane-dense MXU operands,
    # unmasked stores). The raw input dim is left unpadded -- padded x columns would multiply
    # zero weight rows anyway, so no wrapper-side pad/cast pass over the activations is needed.
    dims = [d_in] + [w.shape[1] for w in weights]
    pdims = [d_in] + [_round_up(d, 128) for d in dims[1:]]

    # Row tiling: multiple of 16 (bf16 sublane packing), capped at 512 (1024 only adds VMEM
    # pressure); shrink so the batch grid has >= 2 steps when possible (v7x megacore).
    tm = _round_up(min(tm_max, _round_up(n, 16)), 16)
    n_pad = _round_up(n, tm)
    if n >= 32:
        while n_pad // tm < 2 and tm > 16:
            tm = _round_up(tm // 2, 16)
            n_pad = _round_up(n, tm)

    # Padded params (bf16 weights, f32 biases), built once per call.
    w_p, b_p = [], []
    for i, (w, b) in enumerate(zip(weights, biases)):
        in_p, out_p = pdims[i], pdims[i + 1]
        wp = jnp.zeros((in_p, out_p), jnp.bfloat16)
        wp = wp.at[: w.shape[0], : w.shape[1]].set(w.astype(jnp.bfloat16))
        bp = jnp.zeros((1, out_p), jnp.float32).at[0, : b.shape[0]].set(b.astype(jnp.float32))
        w_p.append(wp)
        b_p.append(bp)

    param_bytes = sum(int(p.size) * p.dtype.itemsize for p in w_p + b_p)
    vmem_cap = _vmem_capacity_bytes()

    # Fused-resident VMEM estimate. The pipeline allocates 2 buffers per input even for
    # constant index_maps, so resident params are counted twice.
    fused_per_step = (
        2 * tm * d_in * x.dtype.itemsize   # streamed x tile (cast to bf16 in-kernel)
        + 2 * tm * pdims[-1] * 2           # streamed bf16 output tile
        + 2 * param_bytes                  # VMEM-resident params (x2 pipeline buffers)
        + 3 * tm * max(pdims) * 4          # live f32/bf16 intermediates
    )
    use_streaming = (force_stream_weights
                     or 2 * param_bytes > int(0.4 * vmem_cap)
                     or fused_per_step > int(0.7 * vmem_cap))

    # Only the row dim of x ever needs padding (no feature pad, no wrapper cast).
    x_in = x if n_pad == n else jnp.pad(x, ((0, n_pad - n), (0, 0)))

    if use_streaming:
        # Weight-streaming fallback for models whose padded weights do not fit VMEM (e.g. v7x).
        z = x_in
        for i in range(num_layers):
            z = _linear_pallas(z, w_p[i], b_p[i], apply_relu=(i != num_layers - 1),
                               tm=tm, vmem_cap=vmem_cap)
        if num_layers > 1:
            z = _l2norm_pallas(z, tm=tm, vmem_cap=vmem_cap)
        out_padded = z
    else:
        # Fused path: x/out row-tiled & auto double-buffered; params full-block and
        # VMEM-resident (constant index_map => no re-fetch across grid steps).
        flat_params = []
        for wp, bp in zip(w_p, b_p):
            flat_params += [wp, bp]

        in_specs = [pl.BlockSpec((tm, d_in), lambda i: (i, 0))]
        for p in flat_params:
            in_specs.append(pl.BlockSpec(p.shape, lambda i: (0, 0)))
        out_specs = pl.BlockSpec((tm, pdims[-1]), lambda i: (i, 0))

        vmem_limit = min(int(0.75 * vmem_cap), max(32 << 20, int(1.25 * fused_per_step)))

        flops = sum(2 * n_pad * pdims[i] * pdims[i + 1] for i in range(num_layers))
        bytes_accessed = (n_pad * d_in * x.dtype.itemsize   # x read (no wrapper cast pass)
                          + n_pad * pdims[-1] * 2           # bf16 output write
                          + param_bytes)                    # params read once (resident)

        out_padded = pl.pallas_call(
            _make_fused_mlp_kernel(num_layers),
            out_shape=jax.ShapeDtypeStruct((n_pad, pdims[-1]), jnp.bfloat16),
            grid=(n_pad // tm,),
            in_specs=in_specs,
            out_specs=out_specs,
            compiler_params=pltpu.CompilerParams(
                dimension_semantics=("parallel",),
                vmem_limit_bytes=int(vmem_limit)),
            cost_estimate=pl.CostEstimate(
                flops=int(flops),
                transcendentals=int(n_pad),
                bytes_accessed=int(bytes_accessed)),
        )(x_in, *flat_params)

    # Drop row/lane padding; cast to the requested dtype only on the small sliced result.
    out = out_padded[:n, :out_dim]
    return out.astype(out_dtype)


# ---------------------------------------------------------------------------
# Reference & test harness
# ---------------------------------------------------------------------------
def init_linear_params(key, in_dim, out_dim):
    """Deterministic init mimicking torch.nn.Linear default (uniform +/- 1/sqrt(in_dim))."""
    kw, kb = jax.random.split(key)
    bound = 1.0 / math.sqrt(in_dim)
    # Stored directly in (in_dim, out_dim) layout (i.e. W.T of the PyTorch weight).
    w = jax.random.uniform(kw, (in_dim, out_dim), jnp.float32, -bound, bound)
    b = jax.random.uniform(kb, (out_dim,), jnp.float32, -bound, bound)
    return w, b


def reference_mlp(x, weights, biases):
    """Pure-JAX f32 reference matching the PyTorch forward (norm='none', dropout=0, no residual)."""
    z = x
    num_layers = len(weights)
    for i, (w, b) in enumerate(zip(weights, biases)):
        z = z @ w + b
        if i != num_layers - 1:
            z = jnp.maximum(z, 0.0)
    if num_layers > 1:
        nrm = jnp.maximum(jnp.linalg.norm(z, axis=-1, keepdims=True), 1e-12)
        z = z / nrm
    return z


if __name__ == "__main__":
    # Small shapes consistent with the module's forward.
    batch = 8
    input_dim = 16
    hidden_dim = 32
    output_dim = 16
    num_layers = 3

    key = jax.random.PRNGKey(0)
    kx, *layer_keys = jax.random.split(key, 1 + num_layers)

    x = jax.random.normal(kx, (batch, input_dim), jnp.float32)

    dims = [input_dim] + [hidden_dim] * (num_layers - 1) + [output_dim]
    weights, biases = [], []
    for lk, (in_d, out_d) in zip(layer_keys, zip(dims[:-1], dims[1:])):
        w, b = init_linear_params(lk, in_d, out_d)
        weights.append(w)
        biases.append(b)

    ref = reference_mlp(x, weights, biases)

    # Fused, weight-resident path (default).
    out = jax.block_until_ready(mlp_forward(x, weights, biases))
    assert out.shape == (batch, output_dim)
    # bf16 matmuls with f32 accumulation => loosened tolerance vs the f32 reference.
    assert jnp.allclose(out, ref, atol=2e-2, rtol=2e-2), "fused path mismatch vs reference"

    # Weight-streaming fallback path (exercised explicitly so it stays correct).
    out_s = jax.block_until_ready(mlp_forward(x, weights, biases, force_stream_weights=True))
    assert out_s.shape == (batch, output_dim)
    assert jnp.allclose(out_s, ref, atol=2e-2, rtol=2e-2), "streamed path mismatch vs reference"

    print("KERNEL_OK")
</pallas_src>

<mosaic_0001>
module attributes {stable_mosaic.version = 11 : i64} {
  func.func @kernel(%arg0: i32, %arg1: memref<16x16xf32, #tpu.memory_space<vmem>>, %arg2: memref<16x128xbf16, #tpu.memory_space<vmem>>, %arg3: memref<1x128xf32, #tpu.memory_space<vmem>>, %arg4: memref<128x128xbf16, #tpu.memory_space<vmem>>, %arg5: memref<1x128xf32, #tpu.memory_space<vmem>>, %arg6: memref<128x128xbf16, #tpu.memory_space<vmem>>, %arg7: memref<1x128xf32, #tpu.memory_space<vmem>>, %arg8: memref<16x128xbf16, #tpu.memory_space<vmem>>) attributes {dimension_semantics = [#tpu.dimension_semantics<parallel>], iteration_bounds = array<i64: 1>, scalar_prefetch = 0 : i64, scratch_operands = 0 : i64, tpu.core_type = #tpu.core_type<tc>, window_params = [{transform_indices = @transform_0, window_bounds = array<i64: 16, 16>}, {pipeline_mode = #tpu.pipeline_mode<synchronous>, transform_indices = @transform_1, window_bounds = array<i64: 16, 128>}, {pipeline_mode = #tpu.pipeline_mode<synchronous>, transform_indices = @transform_2, window_bounds = array<i64: 1, 128>}, {pipeline_mode = #tpu.pipeline_mode<synchronous>, transform_indices = @transform_3, window_bounds = array<i64: 128, 128>}, {pipeline_mode = #tpu.pipeline_mode<synchronous>, transform_indices = @transform_4, window_bounds = array<i64: 1, 128>}, {pipeline_mode = #tpu.pipeline_mode<synchronous>, transform_indices = @transform_5, window_bounds = array<i64: 128, 128>}, {pipeline_mode = #tpu.pipeline_mode<synchronous>, transform_indices = @transform_6, window_bounds = array<i64: 1, 128>}, {transform_indices = @transform_7, window_bounds = array<i64: 16, 128>}]} {
    %c0 = arith.constant 0 : index
    %c0_0 = arith.constant 0 : index
    %0 = vector.load %arg1[%c0, %c0_0] : memref<16x16xf32, #tpu.memory_space<vmem>>, vector<16x16xf32>
    %1 = arith.truncf %0 : vector<16x16xf32> to vector<16x16xbf16>
    %c0_1 = arith.constant 0 : index
    %c0_2 = arith.constant 0 : index
    %2 = vector.load %arg2[%c0_1, %c0_2] : memref<16x128xbf16, #tpu.memory_space<vmem>>, vector<16x128xbf16>
    %c0_3 = arith.constant 0 : index
    %c0_4 = arith.constant 0 : index
    %3 = vector.load %arg3[%c0_3, %c0_4] : memref<1x128xf32, #tpu.memory_space<vmem>>, vector<1x128xf32>
    %cst = arith.constant dense<0.000000e+00> : vector<16x128xf32>
    %4 = tpu.matmul %1, %2, %cst {dimension_numbers = #tpu.dot_dimension_numbers<[1], [0], [0], [1], [0, 0, 1, 1], [], []>} : vector<16x16xbf16>, vector<16x128xbf16>, vector<16x128xf32> -> vector<16x128xf32>
    %5 = vector.broadcast %3 : vector<1x128xf32> to vector<16x128xf32>
    %6 = arith.addf %4, %5 : vector<16x128xf32>
    %cst_5 = arith.constant 0.000000e+00 : f32
    %7 = vector.broadcast %cst_5 : f32 to vector<16x128xf32>
    %8 = arith.maximumf %6, %7 : vector<16x128xf32>
    %9 = arith.truncf %8 : vector<16x128xf32> to vector<16x128xbf16>
    %c0_6 = arith.constant 0 : index
    %c0_7 = arith.constant 0 : index
    %10 = vector.load %arg4[%c0_6, %c0_7] : memref<128x128xbf16, #tpu.memory_space<vmem>>, vector<128x128xbf16>
    %c0_8 = arith.constant 0 : index
    %c0_9 = arith.constant 0 : index
    %11 = vector.load %arg5[%c0_8, %c0_9] : memref<1x128xf32, #tpu.memory_space<vmem>>, vector<1x128xf32>
    %cst_10 = arith.constant dense<0.000000e+00> : vector<16x128xf32>
    %12 = tpu.matmul %9, %10, %cst_10 {dimension_numbers = #tpu.dot_dimension_numbers<[1], [0], [0], [1], [0, 0, 1, 1], [], []>} : vector<16x128xbf16>, vector<128x128xbf16>, vector<16x128xf32> -> vector<16x128xf32>
    %13 = vector.broadcast %11 : vector<1x128xf32> to vector<16x128xf32>
    %14 = arith.addf %12, %13 : vector<16x128xf32>
    %cst_11 = arith.constant 0.000000e+00 : f32
    %15 = vector.broadcast %cst_11 : f32 to vector<16x128xf32>
    %16 = arith.maximumf %14, %15 : vector<16x128xf32>
    %17 = arith.truncf %16 : vector<16x128xf32> to vector<16x128xbf16>
    %c0_12 = arith.constant 0 : index
    %c0_13 = arith.constant 0 : index
    %18 = vector.load %arg6[%c0_12, %c0_13] : memref<128x128xbf16, #tpu.memory_space<vmem>>, vector<128x128xbf16>
    %c0_14 = arith.constant 0 : index
    %c0_15 = arith.constant 0 : index
    %19 = vector.load %arg7[%c0_14, %c0_15] : memref<1x128xf32, #tpu.memory_space<vmem>>, vector<1x128xf32>
    %cst_16 = arith.constant dense<0.000000e+00> : vector<16x128xf32>
    %20 = tpu.matmul %17, %18, %cst_16 {dimension_numbers = #tpu.dot_dimension_numbers<[1], [0], [0], [1], [0, 0, 1, 1], [], []>} : vector<16x128xbf16>, vector<128x128xbf16>, vector<16x128xf32> -> vector<16x128xf32>
    %21 = vector.broadcast %19 : vector<1x128xf32> to vector<16x128xf32>
    %22 = arith.addf %20, %21 : vector<16x128xf32>
    %23 = arith.mulf %22, %22 : vector<16x128xf32>
    %cst_17 = arith.constant dense<0.000000e+00> : vector<16xf32>
    %24 = vector.multi_reduction <add>, %23, %cst_17 [1] : vector<16x128xf32> to vector<16xf32>
    %25 = vector.shape_cast %24 : vector<16xf32> to vector<16x1xf32>
    %cst_18 = arith.constant 1.000000e-24 : f32
    %26 = vector.broadcast %cst_18 : f32 to vector<16x1xf32>
    %27 = arith.maximumf %25, %26 : vector<16x1xf32>
    %28 = math.rsqrt %27 : vector<16x1xf32>
    %29 = vector.broadcast %28 : vector<16x1xf32> to vector<16x128xf32>
    %30 = arith.mulf %22, %29 : vector<16x128xf32>
    %31 = arith.truncf %30 : vector<16x128xf32> to vector<16x128xbf16>
    %c0_19 = arith.constant 0 : index
    %c0_20 = arith.constant 0 : index
    %32 = vector.load %arg8[%c0_19, %c0_20] : memref<16x128xbf16, #tpu.memory_space<vmem>>, vector<16x128xbf16>
    tpu.vector_store %arg8[%c0_19, %c0_20], %31 {strides = array<i32>} : memref<16x128xbf16, #tpu.memory_space<vmem>>, vector<16x128xbf16>,
    return
  }
  func.func @transform_0(%arg0: i32) -> (i32, i32) {
    %c0_i32 = arith.constant 0 : i32
    %c0_i32_0 = arith.constant 0 : i32
    return %arg0, %c0_i32 : i32, i32
  }
  func.func @transform_1(%arg0: i32) -> (i32, i32) {
    %c0_i32 = arith.constant 0 : i32
    %c0_i32_0 = arith.constant 0 : i32
    %c0_i32_1 = arith.constant 0 : i32
    return %c0_i32, %c0_i32_0 : i32, i32
  }
  func.func @transform_2(%arg0: i32) -> (i32, i32) {
    %c0_i32 = arith.constant 0 : i32
    %c0_i32_0 = arith.constant 0 : i32
    %c0_i32_1 = arith.constant 0 : i32
    return %c0_i32, %c0_i32_0 : i32, i32
  }
  func.func @transform_3(%arg0: i32) -> (i32, i32) {
    %c0_i32 = arith.constant 0 : i32
    %c0_i32_0 = arith.constant 0 : i32
    %c0_i32_1 = arith.constant 0 : i32
    return %c0_i32, %c0_i32_0 : i32, i32
  }
  func.func @transform_4(%arg0: i32) -> (i32, i32) {
    %c0_i32 = arith.constant 0 : i32
    %c0_i32_0 = arith.constant 0 : i32
    %c0_i32_1 = arith.constant 0 : i32
    return %c0_i32, %c0_i32_0 : i32, i32
  }
  func.func @transform_5(%arg0: i32) -> (i32, i32) {
    %c0_i32 = arith.constant 0 : i32
    %c0_i32_0 = arith.constant 0 : i32
    %c0_i32_1 = arith.constant 0 : i32
    return %c0_i32, %c0_i32_0 : i32, i32
  }
  func.func @transform_6(%arg0: i32) -> (i32, i32) {
    %c0_i32 = arith.constant 0 : i32
    %c0_i32_0 = arith.constant 0 : i32
    %c0_i32_1 = arith.constant 0 : i32
    return %c0_i32, %c0_i32_0 : i32, i32
  }
  func.func @transform_7(%arg0: i32) -> (i32, i32) {
    %c0_i32 = arith.constant 0 : i32
    %c0_i32_0 = arith.constant 0 : i32
    return %arg0, %c0_i32 : i32, i32
  }
}

</mosaic_0001>

<llo_original>
// kernel: tpu_custom_call.1
$region0: #{tpu_custom_call.1}
  #allocation0 [shape = 'u32[]', space=smem, size = 0x4, offset = 0x4, fixed_abs, tag = 'smem constant byte address 0x4 - core index']
  #allocation1 [shape = 'u32[144,128]{1,0:T(1,128)}', space=vmem, size = 0x12000, scoped, tag = 'internal scratch']
  %s0 = inlined_call_operand.hbm [shape: f32[16,16], index: 0, kind: input, shape index: {}]
  %s1 = inlined_call_operand.hbm [shape: bf16[16,128], index: 1, kind: input, shape index: {}]
  %s2 = inlined_call_operand.vmem [shape: f32[1,128], index: 2, kind: input, shape index: {}]
  %s3 = inlined_call_operand.hbm [shape: bf16[128,128], index: 3, kind: input, shape index: {}]
  %s4 = inlined_call_operand.vmem [shape: f32[1,128], index: 4, kind: input, shape index: {}]
  %s5 = inlined_call_operand.hbm [shape: bf16[128,128], index: 5, kind: input, shape index: {}]
  %s6 = inlined_call_operand.vmem [shape: f32[1,128], index: 6, kind: input, shape index: {}]
  %s7 = inlined_call_operand.hbm [shape: bf16[16,128], index: 7, kind: output, shape index: {}]
  %s8 = sld [smem:[#allocation0]]
  $region54: #{tpu_custom_call.1} parent=0
    _
  %s10 = ssub.s32 1, %s8
  %s11 = scalar_select 0, %s10, %s8
  $region1: #{tpu_custom_call.1} parent=0
    #allocation2 [shape = 'u8[8192]{0}', space=vmem, size = 0x2000, scoped, tag = 'input window, operand 0, single buffered']
    #allocation3 [shape = 's32[1]{0}', space=sflag, size = 0x4, scoped, tag = 'scoped memory for tpu_custom_call.1']
    #allocation4 [shape = 's32[1]{0}', space=sflag, size = 0x4, scoped, tag = 'scoped memory for tpu_custom_call.1']
    #allocation5 [shape = 'u8[4096]{0}', space=vmem, size = 0x1000, scoped, tag = 'input window, operand 1, single buffered']
    #allocation6 [shape = 's32[1]{0}', space=sflag, size = 0x4, scoped, tag = 'scoped memory for tpu_custom_call.1']
    #allocation7 [shape = 'u8[32768]{0}', space=vmem, size = 0x8000, scoped, tag = 'input window, operand 3, single buffered']
    #allocation8 [shape = 'u8[32768]{0}', space=vmem, size = 0x8000, scoped, tag = 'input window, operand 5, single buffered']
    #allocation9 [shape = 's32[1]{0}', space=sflag, size = 0x4, scoped, tag = 'scoped memory for tpu_custom_call.1']
    #allocation10 [shape = 'u8[4096]{0}', space=vmem, size = 0x1000, scoped, tag = 'output window, operand 0, single buffered']
    %12 = vsyncpa [#allocation3], 0
    %13 = vsyncpa [#allocation6], 0
    %14 = vsyncpa [#allocation9], 0
    %15 = vsyncpa [#allocation4], 0
    // Predicated region
    $region2: #{tpu_custom_call.1} parent=1 // pred_check
      _
    $region3: #{tpu_custom_call.1} parent=1 // pred_check_branch
      %17 = sbr.rel (0) target = $region5
    $region4: #{tpu_custom_call.1} parent=1 // pred_region
      %s19 = ssub.s32 256, 256
      %20 = vsyncadd [#allocation3], %s19
      %s21 = sshll.u32 [#allocation2], 4
      %s22 = int_to_ptr.vmem [resolvable:$true] %s21
      %27 = dma.hbm_to_vmem [thread:$0]  %s0, 256, %s22, [#allocation3], 128, 128, 8
    $region5: #{tpu_custom_call.1} parent=1 // pred_fallthru
      _
    // Predicated region
    $region6: #{tpu_custom_call.1} parent=1 // pred_check
      _
    $region7: #{tpu_custom_call.1} parent=1 // pred_check_branch
      %29 = sbr.rel (0) target = $region9
    $region8: #{tpu_custom_call.1} parent=1 // pred_region
      %s31 = ssub.s32 128, 128
      %32 = vsyncadd [#allocation6], %s31
      %s33 = sshll.u32 [#allocation5], 4
      %s34 = int_to_ptr.vmem [resolvable:$true] %s33
      %39 = dma.hbm_to_vmem [thread:$0]  %s1, 128, %s34, [#allocation6], 64, 64, 4
    $region9: #{tpu_custom_call.1} parent=1 // pred_fallthru
      _
    // Predicated region
    $region10: #{tpu_custom_call.1} parent=1 // pred_check
      _
    $region11: #{tpu_custom_call.1} parent=1 // pred_check_branch
      %41 = sbr.rel (0) target = $region13
    $region12: #{tpu_custom_call.1} parent=1 // pred_region
      _
    $region13: #{tpu_custom_call.1} parent=1 // pred_fallthru
      _
    // Predicated region
    $region14: #{tpu_custom_call.1} parent=1 // pred_check
      _
    $region15: #{tpu_custom_call.1} parent=1 // pred_check_branch
      %43 = sbr.rel (0) target = $region17
    $region16: #{tpu_custom_call.1} parent=1 // pred_region
      %s45 = ssub.s32 1024, 1024
      %46 = vsyncadd [#allocation6], %s45
      %s47 = sshll.u32 [#allocation7], 4
      %s48 = int_to_ptr.vmem [resolvable:$true] %s47
      %53 = dma.hbm_to_vmem [thread:$0]  %s3, 1024, %s48, [#allocation6], 64, 64, 4
    $region17: #{tpu_custom_call.1} parent=1 // pred_fallthru
      _
    // Predicated region
    $region18: #{tpu_custom_call.1} parent=1 // pred_check
      _
    $region19: #{tpu_custom_call.1} parent=1 // pred_check_branch
      %55 = sbr.rel (0) target = $region21
    $region20: #{tpu_custom_call.1} parent=1 // pred_region
      _
    $region21: #{tpu_custom_call.1} parent=1 // pred_fallthru
      _
    // Predicated region
    $region22: #{tpu_custom_call.1} parent=1 // pred_check
      _
    $region23: #{tpu_custom_call.1} parent=1 // pred_check_branch
      %57 = sbr.rel (0) target = $region25
    $region24: #{tpu_custom_call.1} parent=1 // pred_region
      %s59 = ssub.s32 1024, 1024
      %60 = vsyncadd [#allocation9], %s59
      %s61 = sshll.u32 [#allocation8], 4
      %s62 = int_to_ptr.vmem [resolvable:$true] %s61
      %67 = dma.hbm_to_vmem [thread:$0]  %s5, 1024, %s62, [#allocation9], 64, 64, 4
    $region25: #{tpu_custom_call.1} parent=1 // pred_fallthru
      _
    // Predicated region
    $region26: #{tpu_custom_call.1} parent=1 // pred_check
      _
    $region27: #{tpu_custom_call.1} parent=1 // pred_check_branch
      %69 = sbr.rel (0) target = $region29
    $region28: #{tpu_custom_call.1} parent=1 // pred_region
      _
    $region29: #{tpu_custom_call.1} parent=1 // pred_fallthru
      _
    // Predicated region
    $region30: #{tpu_custom_call.1} parent=1 // pred_check
      _
    $region31: #{tpu_custom_call.1} parent=1 // pred_check_branch
      %71 = sbr.rel (0) target = $region33
    $region32: #{tpu_custom_call.1} parent=1 // pred_region
      %72 = dma.done [#allocation3], 256
    $region33: #{tpu_custom_call.1} parent=1 // pred_fallthru
      _
    // Predicated region
    $region34: #{tpu_custom_call.1} parent=1 // pred_check
      _
    $region35: #{tpu_custom_call.1} parent=1 // pred_check_branch
      %74 = sbr.rel (0) target = $region37
    $region36: #{tpu_custom_call.1} parent=1 // pred_region
      %75 = dma.done [#allocation6], 128
    $region37: #{tpu_custom_call.1} parent=1 // pred_fallthru
      _
    // Predicated region
    $region38: #{tpu_custom_call.1} parent=1 // pred_check
      _
    $region39: #{tpu_custom_call.1} parent=1 // pred_check_branch
      %77 = sbr.rel (0) target = $region41
    $region40: #{tpu_custom_call.1} parent=1 // pred_region
      %78 = dma.done [#allocation6], 1024
    $region41: #{tpu_custom_call.1} parent=1 // pred_fallthru
      _
    // Predicated region
    $region42: #{tpu_custom_call.1} parent=1 // pred_check
      _
    $region43: #{tpu_custom_call.1} parent=1 // pred_check_branch
      %80 = sbr.rel (0) target = $region45
    $region44: #{tpu_custom_call.1} parent=1 // pred_region
      %81 = dma.done [#allocation9], 1024
    $region45: #{tpu_custom_call.1} parent=1 // pred_fallthru
      _
    %v83 = vld [vmem:[#allocation2] sm:$0xff]
    %v84 = vld [vmem:[#allocation2 + $0x8] sm:$0xff]
    %v85 = vpack.c.bf16 %v84, %v83
    %v86 = vld [vmem:[#allocation5] sm:$0xf]
    %v87 = vld [vmem:[#allocation5 + $0x4] sm:$0xf]
    %v88 = vld [vmem:[%s2] sm:$0x1]
    %v90 = vlaneseq
    %v91 = vshrl.u32 %v90, 7
    %v92 = vsub.s32 0, %v91
    %v93 = vrot.slane %v88, %v92
    %v97 = vunpack.c.l.b16 %v86
    %v98 = vunpack.c.l.b16 %v87
    %v99 = vpack.c.b16 %v98, %v97
    %vm101 = vcmask 130048
    %v103 = vsel %vm101, %v85, 0
    %105 = vmatprep.subr.bf16.mxu0 0
    %106 = vmatpush1.bf16.msra.mxu0 0
    %107 = vmatprep.subr.bf16.mxu0 0
    %108 = vmatpush1.bf16.msra.mxu0 0
    %109 = vmatprep.subr.bf16.mxu0 0
    %110 = vmatpush1.bf16.msra.mxu0 0
    %111 = vmatprep.subr.bf16.mxu0 0
    %112 = vmatpush1.bf16.msra.mxu0 0
    %113 = vmatprep.subr.bf16.mxu0 0
    %114 = vmatpush1.bf16.msra.mxu0 0
    %115 = vmatprep.subr.bf16.mxu0 0
    %116 = vmatpush1.bf16.msra.mxu0 0
    %117 = vmatprep.subr.bf16.mxu0 0
    %118 = vmatpush1.bf16.msra.mxu0 0
    %119 = vmatprep.subr.bf16.mxu0 0
    %120 = vmatpush1.bf16.msra.mxu0 %v99
    %121 = vmatprep.subr.bf16.mxu0 0
    %122 = vmatpush2.bf16.msra.mxu0 0
    %123 = vmatprep.subr.bf16.mxu0 0
    %124 = vmatpush2.bf16.msra.mxu0 0
    %125 = vmatprep.subr.bf16.mxu0 0
    %126 = vmatpush2.bf16.msra.mxu0 0
    %127 = vmatprep.subr.bf16.mxu0 0
    %128 = vmatpush2.bf16.msra.mxu0 0
    %129 = vmatprep.subr.bf16.mxu0 0
    %130 = vmatpush2.bf16.msra.mxu0 0
    %131 = vmatprep.subr.bf16.mxu0 0
    %132 = vmatpush2.bf16.msra.mxu0 0
    %133 = vmatprep.subr.bf16.mxu0 0
    %134 = vmatpush2.bf16.msra.mxu0 0
    %135 = vmatprep.subr.bf16.mxu0 0
    %136 = vmatpush2.bf16.msra.mxu0 0
    %137 = vmatprep.mubr.bf16.mxu0 0
    %138 = vmatmul.mubr.bf16.gmra.mxu0 %v103
    %v139 = vpop.f32.mrf.mxu0
    %v140 = vadd.f32 %v93, %v139
    %v141 = vpop.f32.mrf.mxu0
    %v142 = vpop.f32.mrf.mxu0
    %v143 = vadd.f32 %v93, %v142
    %v144 = vpop.f32.mrf.mxu0
    %145 = vdwg.mxu0
    %v146 = vmax.f32 %v140, 0.0
    %v147 = vmax.f32 %v143, 0.0
    %v148 = vpack.c.bf16 %v147, %v146
    %v149 = vld [vmem:[#allocation7] sm:$0xf]
    %v150 = vld [vmem:[#allocation7 + $0x4] sm:$0xf]
    %v151 = vld [vmem:[#allocation7 + $0x8] sm:$0xf]
    %v152 = vld [vmem:[#allocation7 + $0xc] sm:$0xf]
    %v153 = vld [vmem:[#allocation7 + $0x10] sm:$0xf]
    %v154 = vld [vmem:[#allocation7 + $0x14] sm:$0xf]
    %v155 = vld [vmem:[#allocation7 + $0x18] sm:$0xf]
    %v156 = vld [vmem:[#allocation7 + $0x1c] sm:$0xf]
    %v157 = vld [vmem:[#allocation7 + $0x20] sm:$0xf]
    %v158 = vld [vmem:[#allocation7 + $0x24] sm:$0xf]
    %v159 = vld [vmem:[#allocation7 + $0x28] sm:$0xf]
    %v160 = vld [vmem:[#allocation7 + $0x2c] sm:$0xf]
    %v161 = vld [vmem:[#allocation7 + $0x30] sm:$0xf]
    %v162 = vld [vmem:[#allocation7 + $0x34] sm:$0xf]
    %v163 = vld [vmem:[#allocation7 + $0x38] sm:$0xf]
    %v164 = vld [vmem:[#allocation7 + $0x3c] sm:$0xf]
    %v165 = vld [vmem:[%s4] sm:$0x1]
    %v167 = vlaneseq
    %v168 = vshrl.u32 %v167, 7
    %v169 = vsub.s32 0, %v168
    %v170 = vrot.slane %v165, %v169
    %v188 = vunpack.c.l.b16 %v149
    %v189 = vunpack.c.l.b16 %v150
    %v190 = vunpack.c.l.b16 %v151
    %v191 = vunpack.c.l.b16 %v152
    %v192 = vunpack.c.l.b16 %v153
    %v193 = vunpack.c.l.b16 %v154
    %v194 = vunpack.c.l.b16 %v155
    %v195 = vunpack.c.l.b16 %v156
    %v196 = vunpack.c.l.b16 %v157
    %v197 = vunpack.c.l.b16 %v158
    %v198 = vunpack.c.l.b16 %v159
    %v199 = vunpack.c.l.b16 %v160
    %v200 = vunpack.c.l.b16 %v161
    %v201 = vunpack.c.l.b16 %v162
    %v202 = vunpack.c.l.b16 %v163
    %v203 = vunpack.c.l.b16 %v164
    %v204 = vpack.c.b16 %v189, %v188
    %v205 = vpack.c.b16 %v191, %v190
    %v206 = vpack.c.b16 %v193, %v192
    %v207 = vpack.c.b16 %v195, %v194
    %v208 = vpack.c.b16 %v197, %v196
    %v209 = vpack.c.b16 %v199, %v198
    %v210 = vpack.c.b16 %v201, %v200
    %v211 = vpack.c.b16 %v203, %v202
    %220 = vmatprep.subr.bf16.mxu0 0
    %221 = vmatpush1.bf16.msra.mxu0 %v211
    %222 = vmatprep.subr.bf16.mxu0 0
    %223 = vmatpush1.bf16.msra.mxu0 %v210
    %224 = vmatprep.subr.bf16.mxu0 0
    %225 = vmatpush1.bf16.msra.mxu0 %v209
    %226 = vmatprep.subr.bf16.mxu0 0
    %227 = vmatpush1.bf16.msra.mxu0 %v208
    %228 = vmatprep.subr.bf16.mxu0 0
    %229 = vmatpush1.bf16.msra.mxu0 %v207
    %230 = vmatprep.subr.bf16.mxu0 0
    %231 = vmatpush1.bf16.msra.mxu0 %v206
    %232 = vmatprep.subr.bf16.mxu0 0
    %233 = vmatpush1.bf16.msra.mxu0 %v205
    %234 = vmatprep.subr.bf16.mxu0 0
    %235 = vmatpush1.bf16.msra.mxu0 %v204
    %236 = vmatprep.subr.bf16.mxu0 0
    %237 = vmatpush2.bf16.msra.mxu0 0
    %238 = vmatprep.subr.bf16.mxu0 0
    %239 = vmatpush2.bf16.msra.mxu0 0
    %240 = vmatprep.subr.bf16.mxu0 0
    %241 = vmatpush2.bf16.msra.mxu0 0
    %242 = vmatprep.subr.bf16.mxu0 0
    %243 = vmatpush2.bf16.msra.mxu0 0
    %244 = vmatprep.subr.bf16.mxu0 0
    %245 = vmatpush2.bf16.msra.mxu0 0
    %246 = vmatprep.subr.bf16.mxu0 0
    %247 = vmatpush2.bf16.msra.mxu0 0
    %248 = vmatprep.subr.bf16.mxu0 0
    %249 = vmatpush2.bf16.msra.mxu0 0
    %250 = vmatprep.subr.bf16.mxu0 0
    %251 = vmatpush2.bf16.msra.mxu0 0
    %252 = vmatprep.mubr.bf16.mxu0 0
    %253 = vmatmul.mubr.bf16.gmra.mxu0 %v148
    %v254 = vpop.f32.mrf.mxu0
    %v255 = vadd.f32 %v170, %v254
    %v256 = vpop.f32.mrf.mxu0
    %v257 = vpop.f32.mrf.mxu0
    %v258 = vadd.f32 %v170, %v257
    %v259 = vpop.f32.mrf.mxu0
    %260 = vdwg.mxu0
    %v261 = vmax.f32 %v255, 0.0
    %v262 = vmax.f32 %v258, 0.0
    %v263 = vpack.c.bf16 %v262, %v261
    %v264 = vld [vmem:[#allocation8] sm:$0xf]
    %v265 = vld [vmem:[#allocation8 + $0x4] sm:$0xf]
    %v266 = vld [vmem:[#allocation8 + $0x8] sm:$0xf]
    %v267 = vld [vmem:[#allocation8 + $0xc] sm:$0xf]
    %v268 = vld [vmem:[#allocation8 + $0x10] sm:$0xf]
    %v269 = vld [vmem:[#allocation8 + $0x14] sm:$0xf]
    %v270 = vld [vmem:[#allocation8 + $0x18] sm:$0xf]
    %v271 = vld [vmem:[#allocation8 + $0x1c] sm:$0xf]
    %v272 = vld [vmem:[#allocation8 + $0x20] sm:$0xf]
    %v273 = vld [vmem:[#allocation8 + $0x24] sm:$0xf]
    %v274 = vld [vmem:[#allocation8 + $0x28] sm:$0xf]
    %v275 = vld [vmem:[#allocation8 + $0x2c] sm:$0xf]
    %v276 = vld [vmem:[#allocation8 + $0x30] sm:$0xf]
    %v277 = vld [vmem:[#allocation8 + $0x34] sm:$0xf]
    %v278 = vld [vmem:[#allocation8 + $0x38] sm:$0xf]
    %v279 = vld [vmem:[#allocation8 + $0x3c] sm:$0xf]
    %v280 = vld [vmem:[%s6] sm:$0x1]
    %v282 = vlaneseq
    %v283 = vshrl.u32 %v282, 7
    %v284 = vsub.s32 0, %v283
    %v285 = vrot.slane %v280, %v284
    %v303 = vunpack.c.l.b16 %v264
    %v304 = vunpack.c.l.b16 %v265
    %v305 = vunpack.c.l.b16 %v266
    %v306 = vunpack.c.l.b16 %v267
    %v307 = vunpack.c.l.b16 %v268
    %v308 = vunpack.c.l.b16 %v269
    %v309 = vunpack.c.l.b16 %v270
    %v310 = vunpack.c.l.b16 %v271
    %v311 = vunpack.c.l.b16 %v272
    %v312 = vunpack.c.l.b16 %v273
    %v313 = vunpack.c.l.b16 %v274
    %v314 = vunpack.c.l.b16 %v275
    %v315 = vunpack.c.l.b16 %v276
    %v316 = vunpack.c.l.b16 %v277
    %v317 = vunpack.c.l.b16 %v278
    %v318 = vunpack.c.l.b16 %v279
    %v319 = vpack.c.b16 %v304, %v303
    %v320 = vpack.c.b16 %v306, %v305
    %v321 = vpack.c.b16 %v308, %v307
    %v322 = vpack.c.b16 %v310, %v309
    %v323 = vpack.c.b16 %v312, %v311
    %v324 = vpack.c.b16 %v314, %v313
    %v325 = vpack.c.b16 %v316, %v315
    %v326 = vpack.c.b16 %v318, %v317
    %335 = vmatprep.subr.bf16.mxu0 0
    %336 = vmatpush1.bf16.msra.mxu0 %v326
    %337 = vmatprep.subr.bf16.mxu0 0
    %338 = vmatpush1.bf16.msra.mxu0 %v325
    %339 = vmatprep.subr.bf16.mxu0 0
    %340 = vmatpush1.bf16.msra.mxu0 %v324
    %341 = vmatprep.subr.bf16.mxu0 0
    %342 = vmatpush1.bf16.msra.mxu0 %v323
    %343 = vmatprep.subr.bf16.mxu0 0
    %344 = vmatpush1.bf16.msra.mxu0 %v322
    %345 = vmatprep.subr.bf16.mxu0 0
    %346 = vmatpush1.bf16.msra.mxu0 %v321
    %347 = vmatprep.subr.bf16.mxu0 0
    %348 = vmatpush1.bf16.msra.mxu0 %v320
    %349 = vmatprep.subr.bf16.mxu0 0
    %350 = vmatpush1.bf16.msra.mxu0 %v319
    %351 = vmatprep.subr.bf16.mxu0 0
    %352 = vmatpush2.bf16.msra.mxu0 0
    %353 = vmatprep.subr.bf16.mxu0 0
    %354 = vmatpush2.bf16.msra.mxu0 0
    %355 = vmatprep.subr.bf16.mxu0 0
    %356 = vmatpush2.bf16.msra.mxu0 0
    %357 = vmatprep.subr.bf16.mxu0 0
    %358 = vmatpush2.bf16.msra.mxu0 0
    %359 = vmatprep.subr.bf16.mxu0 0
    %360 = vmatpush2.bf16.msra.mxu0 0
    %361 = vmatprep.subr.bf16.mxu0 0
    %362 = vmatpush2.bf16.msra.mxu0 0
    %363 = vmatprep.subr.bf16.mxu0 0
    %364 = vmatpush2.bf16.msra.mxu0 0
    %365 = vmatprep.subr.bf16.mxu0 0
    %366 = vmatpush2.bf16.msra.mxu0 0
    %367 = vmatprep.mubr.bf16.mxu0 0
    %368 = vmatmul.mubr.bf16.gmra.mxu0 %v263
    %v369 = vpop.f32.mrf.mxu0
    %v370 = vadd.f32 %v285, %v369
    %v371 = vpop.f32.mrf.mxu0
    %v372 = vpop.f32.mrf.mxu0
    %v373 = vadd.f32 %v285, %v372
    %v374 = vpop.f32.mrf.mxu0
    %375 = vdwg.mxu0
    %v376 = vmul.f32 %v370, %v370
    %v377 = vmul.f32 %v373, %v373
    %378 = vadd.xlane.f32.xlu0 %v376
    %v379 = vpop.xlane.xlu0 %378
    %380 = vadd.xlane.f32.xlu0 %v377
    %v381 = vpop.xlane.xlu0 %380
    %v382 = vmax.f32 %v379, 1e-24
    %v383 = vmax.f32 %v381, 1e-24
    %v384 = vrsqrt.pop %v382
    %v385 = vrsqrt.pop %v383
    %v386 = vmul.f32 %v370, %v384
    %v387 = vmul.f32 %v373, %v385
    %v388 = vpack.c.bf16 %v387, %v386
    %v390 = vunpack.c.l.b16 %v388
    %v391 = vunpack.c.h.b16 %v388
    %v392 = vpack.c.b16 %v390, %v390
    %v393 = vpack.c.b16 %v391, %v391
    %396 = vst [vmem:[#allocation10] sm:$0xf] %v392
    %397 = vst [vmem:[#allocation10 + $0x4] sm:$0xf] %v393
    // Predicated region
    $region46: #{tpu_custom_call.1} parent=1 // pred_check
      _
    $region47: #{tpu_custom_call.1} parent=1 // pred_check_branch
      %399 = sbr.rel (0) target = $region49
    $region48: #{tpu_custom_call.1} parent=1 // pred_region
      %s401 = ssub.s32 128, 128
      %402 = vsyncadd [#allocation4], %s401
      %s403 = sshll.u32 [#allocation10], 4
      %s404 = int_to_ptr.vmem [resolvable:$true] %s403
      %409 = dma.vmem_to_hbm [thread:$0]  %s404, 128, %s7, [#allocation4], 64, 64, 4
    $region49: #{tpu_custom_call.1} parent=1 // pred_fallthru
      _
    // Predicated region
    $region50: #{tpu_custom_call.1} parent=1 // pred_check
      _
    $region51: #{tpu_custom_call.1} parent=1 // pred_check_branch
      %411 = sbr.rel (0) target = $region53
    $region52: #{tpu_custom_call.1} parent=1 // pred_region
      %412 = dma.done [#allocation4], 128
    $region53: #{tpu_custom_call.1} parent=1 // pred_fallthru
      _
    %413 = vsyncpa [#allocation3], 1
    %414 = vsyncpa [#allocation6], 1
    %415 = vsyncpa [#allocation9], 1
    %416 = vsyncpa [#allocation4], 1

</llo_original>
